<compile_context>
chip_gen: v7x
topology: tpu7x:2x2x1
jax: 0.10.0
libtpu: 0.0.40
codegen_flags: <defaults>
</compile_context>

<pallas_src>
import functools

import numpy as np
import jax
import jax.numpy as jnp
from jax.experimental import pallas as pl
from jax.experimental.pallas import tpu as pltpu


# ----------------------------------------------------------------------------
# Mask construction (equivalent to LSR_direction.set_mask), host-side numpy.
# ----------------------------------------------------------------------------
def build_mask(same_id_list, num_class, alpha=0.2, beta=0.1):
    mask = np.zeros((num_class, num_class), dtype=np.float32)
    for i in range(num_class):
        mask[i, i] = alpha
    for id_list in same_id_list:
        if len(id_list) == 2:
            a, b = id_list
            mask[a, b] = beta * 2
            mask[b, a] = beta * 2
            mask[a] += (1 - alpha - beta * 2) / num_class
            mask[b] += (1 - alpha - beta * 2) / num_class
        if len(id_list) == 3:
            a, b, c = id_list
            mask[a, b] = beta
            mask[a, c] = beta
            mask[b, a] = beta
            mask[b, c] = beta
            mask[c, a] = beta
            mask[c, b] = beta
            mask[a] += (1 - alpha - 2 * beta) / num_class
            mask[b] += (1 - alpha - 2 * beta) / num_class
            mask[c] += (1 - alpha - 2 * beta) / num_class
    return jnp.asarray(mask)


# ----------------------------------------------------------------------------
# Pallas kernel.
# ----------------------------------------------------------------------------
def lsr_loss_kernel(x_ref, t_ref, mask_ref, rowsum_ref, out_ref, *,
                    batch_size, block_rows):
    # Upcast inside the kernel (bf16 logits stream at input width over HBM).
    x = x_ref[...].astype(jnp.float32)            # [TB, C]
    tgt = t_ref[...]                              # [TB, 1] int32
    mask = mask_ref[...]                          # [C, C]  f32 (resident)
    rowsum = rowsum_ref[...]                      # [C, 128] f32 (resident)

    tb, c = x.shape
    ones = jnp.ones((c, 128), dtype=jnp.float32)  # splat constant, no HBM

    # soft_targets = mask[targets] via one-hot @ mask (exact f32, on the MXU).
    # NOTE: out-of-range target ids (>= C) yield an all-zero soft-target row
    # (documented behaviour; callers must pass ids in [0, C)).
    class_ids = jax.lax.broadcasted_iota(jnp.int32, (tb, c), 1)
    onehot = (class_ids == tgt).astype(jnp.float32)                    # [TB, C]
    soft = jnp.dot(onehot, mask, preferred_element_type=jnp.float32)   # [TB, C]

    # Cross-lane reductions routed to the MXU (every output lane is identical,
    # lane 0 is kept).  Only the row-max stays on the XLU.
    sum_t = jnp.dot(onehot, rowsum, preferred_element_type=jnp.float32)[:, :1]
    m = jnp.max(x, axis=1, keepdims=True)                              # [TB, 1]
    p = jnp.exp(x - m)                                                 # EUP
    sum_exp = jnp.dot(p, ones, preferred_element_type=jnp.float32)[:, :1]
    dot_tx = jnp.dot(soft * x, ones, preferred_element_type=jnp.float32)[:, :1]

    lse = m + jnp.log(sum_exp)                                         # [TB, 1]
    # per_row = -sum(t * (x - lse)) = sum(t)*lse - sum(t*x)
    per_row = sum_t * lse - dot_tx                                     # [TB, 1]

    if batch_size % block_rows != 0:
        # Only traced when the batch is ragged: zero the padded rows of the
        # final block.  This is a per-ROW ([TB, 1]) compare+select, not the
        # old per-element [TB, C] masking; any NaN/Inf from garbage padded
        # rows stays row-contained and is selected away here.
        blk = pl.program_id(0)
        row_ids = blk * block_rows + jax.lax.broadcasted_iota(
            jnp.int32, (tb, 1), 0)
        per_row = jnp.where(row_ids < batch_size, per_row, 0.0)

    # Lane-dense unmasked store of this block's partial sum.
    out_ref[...] = jnp.full(out_ref.shape, jnp.sum(per_row), dtype=jnp.float32)


# ----------------------------------------------------------------------------
# Block-size selection with a realistic VMEM footprint model.
# ----------------------------------------------------------------------------
def _pick_block_rows(batch, num_class, itemsize, *, target_blocks=8,
                     vmem_budget_bytes=24 * 1024 * 1024):
    c = num_class
    # Resident operands (independent of TB): mask (2 buffers — kept
    # conservatively double-buffered for portability instead of relying on
    # pipeline_mode=Buffered(1)), rowsum_rep (2 buffers), output block.
    resident = 2 * c * c * 4 + 2 * c * 128 * 4 + 2 * 8 * 128 * 4
    avail = max(vmem_budget_bytes - resident, 1 * 1024 * 1024)
    # Per-row bytes: 2x logits buffers + ~6 f32 [., C] temporaries
    # (x upcast, onehot, soft, p, soft*x, matvec outputs) + 2x targets tile
    # (a (TB, 1) int32 block pads to 128 lanes in VMEM).
    per_row = c * (2 * itemsize + 6 * 4) + 2 * 128 * 4
    tb = avail // per_row
    # Keep >= ~target_blocks grid steps when the batch allows it, so the
    # "parallel" axis can shard across v7x's two TensorCores and the logits
    # DMA has pipeline depth to hide behind.
    tb_par = -(-batch // target_blocks)  # ceil
    tb = min(tb, max(tb_par, 8))
    tb = min(tb, 2048)
    tb = max(8, (tb // 8) * 8)
    # Never exceed the (8-rounded) batch.
    tb = min(tb, max(8, ((batch + 7) // 8) * 8))
    return int(tb)


def lsr_direction_forward(inputs, targets, mask, *, block_rows=None):
    """inputs: [B, C] float logits, targets: [B] int, mask: [C, C] float."""
    b, c = inputs.shape
    itemsize = jnp.dtype(inputs.dtype).itemsize
    if block_rows is None:
        block_rows = _pick_block_rows(b, c, itemsize)
    nb = pl.cdiv(b, block_rows)

    targets2d = targets.astype(jnp.int32).reshape(b, 1)
    mask_f32 = mask.astype(jnp.float32)
    # Row-sums of the mask, replicated across 128 lanes so the in-kernel
    # gather (onehot @ rowsum) is a plain lane-dense MXU matvec.
    rowsum_rep = jnp.broadcast_to(
        jnp.sum(mask_f32, axis=1, keepdims=True), (c, 128))

    # TODO(synk): for C >~ 2000 on v7x (64 MiB VMEM) the resident [C, C] mask
    # no longer fits next to the batch tile; that regime needs a class-tiled
    # online-LSE variant with the mask left in HBM (memory_space=pl.ANY).

    kernel = functools.partial(
        lsr_loss_kernel, batch_size=b, block_rows=block_rows)

    cost = pl.CostEstimate(
        flops=2 * b * c * c + 3 * 2 * b * c * 128 + 8 * b * c,
        transcendentals=b * c + b,
        bytes_accessed=(b * c * itemsize + b * 4 + c * c * 4 + c * 128 * 4
                        + nb * 8 * 128 * 4),
    )

    partials = pl.pallas_call(
        kernel,
        out_shape=jax.ShapeDtypeStruct((nb, 8, 128), jnp.float32),
        grid_spec=pltpu.PrefetchScalarGridSpec(
            num_scalar_prefetch=0,
            grid=(nb,),
            in_specs=[
                pl.BlockSpec((block_rows, c), lambda i: (i, 0)),   # logits
                pl.BlockSpec((block_rows, 1), lambda i: (i, 0)),   # target ids
                pl.BlockSpec((c, c), lambda i: (0, 0)),            # mask
                pl.BlockSpec((c, 128), lambda i: (0, 0)),          # rowsum(mask)
            ],
            out_specs=pl.BlockSpec((1, 8, 128), lambda i: (i, 0, 0)),
        ),
        compiler_params=pltpu.CompilerParams(
            dimension_semantics=("parallel",),
            vmem_limit_bytes=48 * 1024 * 1024,
        ),
        cost_estimate=cost,
    )(inputs, targets2d, mask_f32, rowsum_rep)

    # Tiny finalize outside the kernel: sum of per-block partials / batch.
    return jnp.sum(partials[:, 0, 0]) / b


# ----------------------------------------------------------------------------
# Pure-JAX reference for correctness checking.
# ----------------------------------------------------------------------------
def lsr_direction_ref(inputs, targets, mask):
    soft_targets = jnp.take(mask, targets, axis=0)
    logp = jax.nn.log_softmax(inputs.astype(jnp.float32), axis=1)
    loss = -(soft_targets * logp)
    return jnp.mean(jnp.sum(loss, axis=1), axis=0)


if __name__ == "__main__":
    B, C = 8, 32                      # batch, num_class
    alpha, beta = 0.2, 0.1
    same_id_list = [[0, 1], [2, 3, 4], [10, 11]]

    mask = build_mask(same_id_list, C, alpha=alpha, beta=beta)

    key = jax.random.PRNGKey(0)
    k_x, k_t = jax.random.split(key)
    inputs = jax.random.normal(k_x, (B, C), dtype=jnp.float32)
    targets = jax.random.randint(k_t, (B,), 0, C, dtype=jnp.int32)

    loss = lsr_direction_forward(inputs, targets, mask)
    jax.block_until_ready(loss)

    ref = lsr_direction_ref(inputs, targets, mask)
    np.testing.assert_allclose(np.asarray(loss), np.asarray(ref),
                               rtol=1e-5, atol=1e-5)

    print("KERNEL_OK")
</pallas_src>

<mosaic_0001>
module attributes {stable_mosaic.version = 11 : i64} {
  func.func @lsr_loss_kernel(%arg0: i32, %arg1: memref<8x32xf32, #tpu.memory_space<vmem>>, %arg2: memref<8x1xi32, #tpu.memory_space<vmem>>, %arg3: memref<32x32xf32, #tpu.memory_space<vmem>>, %arg4: memref<32x128xf32, #tpu.memory_space<vmem>>, %arg5: memref<1x8x128xf32, #tpu.memory_space<vmem>>) attributes {dimension_semantics = [#tpu.dimension_semantics<parallel>], iteration_bounds = array<i64: 1>, scalar_prefetch = 0 : i64, scratch_operands = 0 : i64, tpu.core_type = #tpu.core_type<tc>, window_params = [{transform_indices = @transform_0, window_bounds = array<i64: 8, 32>}, {transform_indices = @transform_1, window_bounds = array<i64: 8, 1>}, {pipeline_mode = #tpu.pipeline_mode<synchronous>, transform_indices = @transform_2, window_bounds = array<i64: 32, 32>}, {pipeline_mode = #tpu.pipeline_mode<synchronous>, transform_indices = @transform_3, window_bounds = array<i64: 32, 128>}, {transform_indices = @transform_4, window_bounds = array<i64: 1, 8, 128>}]} {
    %c0 = arith.constant 0 : index
    %c0_0 = arith.constant 0 : index
    %0 = vector.load %arg1[%c0, %c0_0] : memref<8x32xf32, #tpu.memory_space<vmem>>, vector<8x32xf32>
    %c0_1 = arith.constant 0 : index
    %c0_2 = arith.constant 0 : index
    %1 = vector.load %arg2[%c0_1, %c0_2] : memref<8x1xi32, #tpu.memory_space<vmem>>, vector<8x1xi32>
    %c0_3 = arith.constant 0 : index
    %c0_4 = arith.constant 0 : index
    %2 = vector.load %arg3[%c0_3, %c0_4] : memref<32x32xf32, #tpu.memory_space<vmem>>, vector<32x32xf32>
    %c0_5 = arith.constant 0 : index
    %c0_6 = arith.constant 0 : index
    %3 = vector.load %arg4[%c0_5, %c0_6] : memref<32x128xf32, #tpu.memory_space<vmem>>, vector<32x128xf32>
    %cst = arith.constant 1.000000e+00 : f32
    %4 = vector.broadcast %cst : f32 to vector<32x128xf32>
    %5 = tpu.iota {dimensions = array<i32: 1>} : vector<8x32xi32>
    %6 = vector.broadcast %1 : vector<8x1xi32> to vector<8x32xi32>
    %7 = arith.cmpi eq, %5, %6 : vector<8x32xi32>
    %8 = arith.extui %7 : vector<8x32xi1> to vector<8x32xi32>
    %9 = arith.sitofp %8 : vector<8x32xi32> to vector<8x32xf32>
    %cst_7 = arith.constant dense<0.000000e+00> : vector<8x32xf32>
    %10 = tpu.matmul %9, %2, %cst_7 {dimension_numbers = #tpu.dot_dimension_numbers<[1], [0], [0], [1], [0, 0, 1, 1], [], []>} : vector<8x32xf32>, vector<32x32xf32>, vector<8x32xf32> -> vector<8x32xf32>
    %cst_8 = arith.constant dense<0.000000e+00> : vector<8x128xf32>
    %11 = tpu.matmul %9, %3, %cst_8 {dimension_numbers = #tpu.dot_dimension_numbers<[1], [0], [0], [1], [0, 0, 1, 1], [], []>} : vector<8x32xf32>, vector<32x128xf32>, vector<8x128xf32> -> vector<8x128xf32>
    %12 = vector.extract_strided_slice %11 {offsets = [0, 0], sizes = [8, 1], strides = [1, 1]} : vector<8x128xf32> to vector<8x1xf32>
    %cst_9 = arith.constant dense<0xFF800000> : vector<8xf32>
    %13 = vector.multi_reduction <maximumf>, %0, %cst_9 [1] : vector<8x32xf32> to vector<8xf32>
    %14 = vector.shape_cast %13 : vector<8xf32> to vector<8x1xf32>
    %15 = vector.broadcast %14 : vector<8x1xf32> to vector<8x32xf32>
    %16 = arith.subf %0, %15 : vector<8x32xf32>
    %17 = math.exp %16 : vector<8x32xf32>
    %cst_10 = arith.constant dense<0.000000e+00> : vector<8x128xf32>
    %18 = tpu.matmul %17, %4, %cst_10 {dimension_numbers = #tpu.dot_dimension_numbers<[1], [0], [0], [1], [0, 0, 1, 1], [], []>} : vector<8x32xf32>, vector<32x128xf32>, vector<8x128xf32> -> vector<8x128xf32>
    %19 = vector.extract_strided_slice %18 {offsets = [0, 0], sizes = [8, 1], strides = [1, 1]} : vector<8x128xf32> to vector<8x1xf32>
    %20 = arith.mulf %10, %0 : vector<8x32xf32>
    %cst_11 = arith.constant dense<0.000000e+00> : vector<8x128xf32>
    %21 = tpu.matmul %20, %4, %cst_11 {dimension_numbers = #tpu.dot_dimension_numbers<[1], [0], [0], [1], [0, 0, 1, 1], [], []>} : vector<8x32xf32>, vector<32x128xf32>, vector<8x128xf32> -> vector<8x128xf32>
    %22 = vector.extract_strided_slice %21 {offsets = [0, 0], sizes = [8, 1], strides = [1, 1]} : vector<8x128xf32> to vector<8x1xf32>
    %23 = math.log %19 : vector<8x1xf32>
    %24 = arith.addf %14, %23 : vector<8x1xf32>
    %25 = arith.mulf %12, %24 : vector<8x1xf32>
    %26 = arith.subf %25, %22 : vector<8x1xf32>
    %27 = vector.shape_cast %26 : vector<8x1xf32> to vector<1x8x1xf32>
    %cst_12 = arith.constant dense<0.000000e+00> : vector<1xf32>
    %28 = vector.multi_reduction <add>, %27, %cst_12 [1, 2] : vector<1x8x1xf32> to vector<1xf32>
    %29 = vector.shape_cast %28 : vector<1xf32> to vector<1x1x1xf32>
    %30 = vector.extract %29[0, 0, 0] : f32 from vector<1x1x1xf32>
    %31 = vector.broadcast %30 : f32 to vector<1x8x128xf32>
    %c0_13 = arith.constant 0 : index
    %c0_14 = arith.constant 0 : index
    %c0_15 = arith.constant 0 : index
    %32 = vector.load %arg5[%c0_13, %c0_14, %c0_15] : memref<1x8x128xf32, #tpu.memory_space<vmem>>, vector<1x8x128xf32>
    tpu.vector_store %arg5[%c0_13, %c0_14, %c0_15], %31 {strides = array<i32>} : memref<1x8x128xf32, #tpu.memory_space<vmem>>, vector<1x8x128xf32>,
    return
  }
  func.func @transform_0(%arg0: i32) -> (i32, i32) {
    %c0_i32 = arith.constant 0 : i32
    %c0_i32_0 = arith.constant 0 : i32
    return %arg0, %c0_i32 : i32, i32
  }
  func.func @transform_1(%arg0: i32) -> (i32, i32) {
    %c0_i32 = arith.constant 0 : i32
    %c0_i32_0 = arith.constant 0 : i32
    return %arg0, %c0_i32 : i32, i32
  }
  func.func @transform_2(%arg0: i32) -> (i32, i32) {
    %c0_i32 = arith.constant 0 : i32
    %c0_i32_0 = arith.constant 0 : i32
    %c0_i32_1 = arith.constant 0 : i32
    return %c0_i32, %c0_i32_0 : i32, i32
  }
  func.func @transform_3(%arg0: i32) -> (i32, i32) {
    %c0_i32 = arith.constant 0 : i32
    %c0_i32_0 = arith.constant 0 : i32
    %c0_i32_1 = arith.constant 0 : i32
    return %c0_i32, %c0_i32_0 : i32, i32
  }
  func.func @transform_4(%arg0: i32) -> (i32, i32, i32) {
    %c0_i32 = arith.constant 0 : i32
    %c0_i32_0 = arith.constant 0 : i32
    %c0_i32_1 = arith.constant 0 : i32
    return %arg0, %c0_i32, %c0_i32_0 : i32, i32, i32
  }
}

</mosaic_0001>

<llo_original>
// kernel: tpu_custom_call.1
$region0: #{tpu_custom_call.1}
  #allocation0 [shape = 'u32[]', space=smem, size = 0x4, offset = 0x4, fixed_abs, tag = 'smem constant byte address 0x4 - core index']
  #allocation1 [shape = 'u32[144,128]{1,0:T(1,128)}', space=vmem, size = 0x12000, scoped, tag = 'internal scratch']
  %s0 = inlined_call_operand.vmem [shape: f32[8,32], index: 0, kind: input, shape index: {}]
  %s1 = inlined_call_operand.vmem [shape: s32[8,1], index: 1, kind: input, shape index: {}]
  %s2 = inlined_call_operand.hbm [shape: f32[32,32], index: 2, kind: input, shape index: {}]
  %s3 = inlined_call_operand.hbm [shape: f32[32,128], index: 3, kind: input, shape index: {}]
  %s4 = inlined_call_operand.hbm [shape: f32[1,8,128], index: 4, kind: output, shape index: {}]
  %s5 = sld [smem:[#allocation0]]
  $region34: #{tpu_custom_call.1} parent=0
    _
  %s7 = ssub.s32 1, %s5
  %s8 = scalar_select 0, %s7, %s5
  $region1: #{tpu_custom_call.1} parent=0
    #allocation2 [shape = 'u8[16384]{0}', space=vmem, size = 0x4000, scoped, tag = 'input window, operand 2, single buffered']
    #allocation3 [shape = 's32[1]{0}', space=sflag, size = 0x4, scoped, tag = 'scoped memory for tpu_custom_call.1']
    #allocation4 [shape = 's32[1]{0}', space=sflag, size = 0x4, scoped, tag = 'scoped memory for tpu_custom_call.1']
    #allocation5 [shape = 'u8[16384]{0}', space=vmem, size = 0x4000, scoped, tag = 'input window, operand 3, single buffered']
    #allocation6 [shape = 's32[1]{0}', space=sflag, size = 0x4, scoped, tag = 'scoped memory for tpu_custom_call.1']
    #allocation7 [shape = 'u8[4096]{0}', space=vmem, size = 0x1000, scoped, tag = 'output window, operand 0, single buffered']
    %9 = vsyncpa [#allocation3], 0
    %10 = vsyncpa [#allocation6], 0
    %11 = vsyncpa [#allocation4], 0
    // Predicated region
    $region2: #{tpu_custom_call.1} parent=1 // pred_check
      _
    $region3: #{tpu_custom_call.1} parent=1 // pred_check_branch
      %13 = sbr.rel (0) target = $region5
    $region4: #{tpu_custom_call.1} parent=1 // pred_region
      _
    $region5: #{tpu_custom_call.1} parent=1 // pred_fallthru
      _
    // Predicated region
    $region6: #{tpu_custom_call.1} parent=1 // pred_check
      _
    $region7: #{tpu_custom_call.1} parent=1 // pred_check_branch
      %15 = sbr.rel (0) target = $region9
    $region8: #{tpu_custom_call.1} parent=1 // pred_region
      _
    $region9: #{tpu_custom_call.1} parent=1 // pred_fallthru
      _
    // Predicated region
    $region10: #{tpu_custom_call.1} parent=1 // pred_check
      _
    $region11: #{tpu_custom_call.1} parent=1 // pred_check_branch
      %17 = sbr.rel (0) target = $region13
    $region12: #{tpu_custom_call.1} parent=1 // pred_region
      %s19 = ssub.s32 512, 512
      %20 = vsyncadd [#allocation3], %s19
      %s21 = sshll.u32 [#allocation2], 4
      %s22 = int_to_ptr.vmem [resolvable:$true] %s21
      %27 = dma.hbm_to_vmem [thread:$0]  %s2, 512, %s22, [#allocation3], 128, 128, 8
    $region13: #{tpu_custom_call.1} parent=1 // pred_fallthru
      _
    // Predicated region
    $region14: #{tpu_custom_call.1} parent=1 // pred_check
      _
    $region15: #{tpu_custom_call.1} parent=1 // pred_check_branch
      %29 = sbr.rel (0) target = $region17
    $region16: #{tpu_custom_call.1} parent=1 // pred_region
      %s31 = ssub.s32 512, 512
      %32 = vsyncadd [#allocation6], %s31
      %s33 = sshll.u32 [#allocation5], 4
      %s34 = int_to_ptr.vmem [resolvable:$true] %s33
      %39 = dma.hbm_to_vmem [thread:$0]  %s3, 512, %s34, [#allocation6], 128, 128, 8
    $region17: #{tpu_custom_call.1} parent=1 // pred_fallthru
      _
    // Predicated region
    $region18: #{tpu_custom_call.1} parent=1 // pred_check
      _
    $region19: #{tpu_custom_call.1} parent=1 // pred_check_branch
      %41 = sbr.rel (0) target = $region21
    $region20: #{tpu_custom_call.1} parent=1 // pred_region
      %42 = dma.done [#allocation3], 512
    $region21: #{tpu_custom_call.1} parent=1 // pred_fallthru
      _
    // Predicated region
    $region22: #{tpu_custom_call.1} parent=1 // pred_check
      _
    $region23: #{tpu_custom_call.1} parent=1 // pred_check_branch
      %44 = sbr.rel (0) target = $region25
    $region24: #{tpu_custom_call.1} parent=1 // pred_region
      %45 = dma.done [#allocation6], 512
    $region25: #{tpu_custom_call.1} parent=1 // pred_fallthru
      _
    %v46 = vld [vmem:[%s0] sm:$0xff]
    %v47 = vld [vmem:[%s1] sm:$0xff]
    %v48 = vld [vmem:[#allocation2] sm:$0xff]
    %v49 = vld [vmem:[#allocation2 + $0x8] sm:$0xff]
    %v50 = vld [vmem:[#allocation2 + $0x10] sm:$0xff]
    %v51 = vld [vmem:[#allocation2 + $0x18] sm:$0xff]
    %v52 = vld [vmem:[#allocation5] sm:$0xff]
    %v53 = vld [vmem:[#allocation5 + $0x8] sm:$0xff]
    %v54 = vld [vmem:[#allocation5 + $0x10] sm:$0xff]
    %v55 = vld [vmem:[#allocation5 + $0x18] sm:$0xff]
    %v56 = vlaneseq
    %v57 = vand.u32 %v56, 127
    %58 = vset.pattern.permute.xlu0 0
    %59 = vperm.xlu0 %58, %v47
    %v60 = vpop.permute.xlu0 %59
    %vm61 = vcmp.eq.s32.totalorder %v57, %v60
    %v62 = vsel %vm61, 1, 0
    %v63 = vcvt.s32.f32 %v62
    %vm64 = vcmask 261120
    %v66 = vsel %vm64, %v63, 0
    %68 = vmatprep.subr.mxu0 0.0
    %69 = vmatpush1.msra.mxu0 %v48
    %70 = vmatprep.subr.mxu0 0.0
    %71 = vmatpush1.msra.mxu0 %v49
    %72 = vmatprep.subr.mxu0 0.0
    %73 = vmatpush1.msra.mxu0 %v50
    %74 = vmatprep.subr.mxu0 0.0
    %75 = vmatpush1.msra.mxu0 %v51
    %76 = vmatprep.subr.mxu0 0.0
    %77 = vmatpush1.msra.mxu0 0.0
    %78 = vmatprep.subr.mxu0 0.0
    %79 = vmatpush1.msra.mxu0 0.0
    %80 = vmatprep.subr.mxu0 0.0
    %81 = vmatpush1.msra.mxu0 0.0
    %82 = vmatprep.subr.mxu0 0.0
    %83 = vmatpush1.msra.mxu0 0.0
    %84 = vmatprep.subr.mxu0 0.0
    %85 = vmatpush1.msra.mxu0 0.0
    %86 = vmatprep.subr.mxu0 0.0
    %87 = vmatpush1.msra.mxu0 0.0
    %88 = vmatprep.subr.mxu0 0.0
    %89 = vmatpush1.msra.mxu0 0.0
    %90 = vmatprep.subr.mxu0 0.0
    %91 = vmatpush1.msra.mxu0 0.0
    %92 = vmatprep.subr.mxu0 0.0
    %93 = vmatpush1.msra.mxu0 0.0
    %94 = vmatprep.subr.mxu0 0.0
    %95 = vmatpush1.msra.mxu0 0.0
    %96 = vmatprep.subr.mxu0 0.0
    %97 = vmatpush1.msra.mxu0 0.0
    %98 = vmatprep.subr.mxu0 0.0
    %99 = vmatpush1.msra.mxu0 0.0
    %100 = vmatprep.subr.mxu0 0.0
    %101 = vmatpush1.msra.mxu0 0.0
    %102 = vmatprep.subr.mxu0 0.0
    %103 = vmatpush1.msra.mxu0 0.0
    %104 = vmatprep.subr.mxu0 0.0
    %105 = vmatpush1.msra.mxu0 0.0
    %106 = vmatprep.subr.mxu0 0.0
    %107 = vmatpush1.msra.mxu0 0.0
    %108 = vmatprep.subr.mxu0 0.0
    %109 = vmatpush1.msra.mxu0 0.0
    %110 = vmatprep.subr.mxu0 0.0
    %111 = vmatpush1.msra.mxu0 0.0
    %112 = vmatprep.subr.mxu0 0.0
    %113 = vmatpush1.msra.mxu0 0.0
    %114 = vmatprep.subr.mxu0 0.0
    %115 = vmatpush1.msra.mxu0 0.0
    %116 = vmatprep.subr.mxu0 0.0
    %117 = vmatpush1.msra.mxu0 0.0
    %118 = vmatprep.subr.mxu0 0.0
    %119 = vmatpush1.msra.mxu0 0.0
    %120 = vmatprep.subr.mxu0 0.0
    %121 = vmatpush1.msra.mxu0 0.0
    %122 = vmatprep.subr.mxu0 0.0
    %123 = vmatpush1.msra.mxu0 0.0
    %124 = vmatprep.subr.mxu0 0.0
    %125 = vmatpush1.msra.mxu0 0.0
    %126 = vmatprep.subr.mxu0 0.0
    %127 = vmatpush1.msra.mxu0 0.0
    %128 = vmatprep.subr.mxu0 0.0
    %129 = vmatpush1.msra.mxu0 0.0
    %130 = vmatprep.subr.mxu0 0.0
    %131 = vmatpush1.msra.mxu0 0.0
    %132 = vmatprep.mubr.f32.mxu0 0.0
    %133 = vmatmul.mubr.f32.gmra.mrb[0].mxu0 %v66
    %v134 = vpop.f32.mrb[0].mxu0
    %v135 = vadd.f32 0.0, %v134
    %v136 = vpop.f32.mrb[0].mxu0
    %137 = vdwg.mxu0
    %138 = vmatprep.subr.mxu0 0.0
    %139 = vmatpush1.msra.mxu0 %v52
    %140 = vmatprep.subr.mxu0 0.0
    %141 = vmatpush1.msra.mxu0 %v53
    %142 = vmatprep.subr.mxu0 0.0
    %143 = vmatpush1.msra.mxu0 %v54
    %144 = vmatprep.subr.mxu0 0.0
    %145 = vmatpush1.msra.mxu0 %v55
    %146 = vmatprep.subr.mxu0 0.0
    %147 = vmatpush1.msra.mxu0 0.0
    %148 = vmatprep.subr.mxu0 0.0
    %149 = vmatpush1.msra.mxu0 0.0
    %150 = vmatprep.subr.mxu0 0.0
    %151 = vmatpush1.msra.mxu0 0.0
    %152 = vmatprep.subr.mxu0 0.0
    %153 = vmatpush1.msra.mxu0 0.0
    %154 = vmatprep.subr.mxu0 0.0
    %155 = vmatpush1.msra.mxu0 0.0
    %156 = vmatprep.subr.mxu0 0.0
    %157 = vmatpush1.msra.mxu0 0.0
    %158 = vmatprep.subr.mxu0 0.0
    %159 = vmatpush1.msra.mxu0 0.0
    %160 = vmatprep.subr.mxu0 0.0
    %161 = vmatpush1.msra.mxu0 0.0
    %162 = vmatprep.subr.mxu0 0.0
    %163 = vmatpush1.msra.mxu0 0.0
    %164 = vmatprep.subr.mxu0 0.0
    %165 = vmatpush1.msra.mxu0 0.0
    %166 = vmatprep.subr.mxu0 0.0
    %167 = vmatpush1.msra.mxu0 0.0
    %168 = vmatprep.subr.mxu0 0.0
    %169 = vmatpush1.msra.mxu0 0.0
    %170 = vmatprep.subr.mxu0 0.0
    %171 = vmatpush1.msra.mxu0 0.0
    %172 = vmatprep.subr.mxu0 0.0
    %173 = vmatpush1.msra.mxu0 0.0
    %174 = vmatprep.subr.mxu0 0.0
    %175 = vmatpush1.msra.mxu0 0.0
    %176 = vmatprep.subr.mxu0 0.0
    %177 = vmatpush1.msra.mxu0 0.0
    %178 = vmatprep.subr.mxu0 0.0
    %179 = vmatpush1.msra.mxu0 0.0
    %180 = vmatprep.subr.mxu0 0.0
    %181 = vmatpush1.msra.mxu0 0.0
    %182 = vmatprep.subr.mxu0 0.0
    %183 = vmatpush1.msra.mxu0 0.0
    %184 = vmatprep.subr.mxu0 0.0
    %185 = vmatpush1.msra.mxu0 0.0
    %186 = vmatprep.subr.mxu0 0.0
    %187 = vmatpush1.msra.mxu0 0.0
    %188 = vmatprep.subr.mxu0 0.0
    %189 = vmatpush1.msra.mxu0 0.0
    %190 = vmatprep.subr.mxu0 0.0
    %191 = vmatpush1.msra.mxu0 0.0
    %192 = vmatprep.subr.mxu0 0.0
    %193 = vmatpush1.msra.mxu0 0.0
    %194 = vmatprep.subr.mxu0 0.0
    %195 = vmatpush1.msra.mxu0 0.0
    %196 = vmatprep.subr.mxu0 0.0
    %197 = vmatpush1.msra.mxu0 0.0
    %198 = vmatprep.subr.mxu0 0.0
    %199 = vmatpush1.msra.mxu0 0.0
    %200 = vmatprep.subr.mxu0 0.0
    %201 = vmatpush1.msra.mxu0 0.0
    %202 = vmatprep.mubr.f32.mxu0 0.0
    %203 = vmatmul.mubr.f32.gmra.mrb[0].mxu0 %v66
    %v204 = vpop.f32.mrb[0].mxu0
    %v205 = vadd.f32 0.0, %v204
    %v206 = vpop.f32.mrb[0].mxu0
    %207 = vdwg.mxu0
    %v208 = vsel %vm64, %v46, -inf
    %209 = vmax.xlane.f32.xlu0 %v208
    %v210 = vpop.xlane.xlu0 %209
    %v211 = vsub.f32 %v46, %v210
    %v212 = vmul.f32 %v211, 1.442695
    %v213 = vpow.pop %v212
    %v215 = vsel %vm64, %v213, 0
    %217 = vmatprep.subr.mxu0 0.0
    %218 = vmatpush1.msra.mxu0 1.0
    %219 = vmatprep.subr.mxu0 0.0
    %220 = vmatpush1.msra.mxu0 1.0
    %221 = vmatprep.subr.mxu0 0.0
    %222 = vmatpush1.msra.mxu0 1.0
    %223 = vmatprep.subr.mxu0 0.0
    %224 = vmatpush1.msra.mxu0 1.0
    %225 = vmatprep.subr.mxu0 0.0
    %226 = vmatpush1.msra.mxu0 0.0
    %227 = vmatprep.subr.mxu0 0.0
    %228 = vmatpush1.msra.mxu0 0.0
    %229 = vmatprep.subr.mxu0 0.0
    %230 = vmatpush1.msra.mxu0 0.0
    %231 = vmatprep.subr.mxu0 0.0
    %232 = vmatpush1.msra.mxu0 0.0
    %233 = vmatprep.subr.mxu0 0.0
    %234 = vmatpush1.msra.mxu0 0.0
    %235 = vmatprep.subr.mxu0 0.0
    %236 = vmatpush1.msra.mxu0 0.0
    %237 = vmatprep.subr.mxu0 0.0
    %238 = vmatpush1.msra.mxu0 0.0
    %239 = vmatprep.subr.mxu0 0.0
    %240 = vmatpush1.msra.mxu0 0.0
    %241 = vmatprep.subr.mxu0 0.0
    %242 = vmatpush1.msra.mxu0 0.0
    %243 = vmatprep.subr.mxu0 0.0
    %244 = vmatpush1.msra.mxu0 0.0
    %245 = vmatprep.subr.mxu0 0.0
    %246 = vmatpush1.msra.mxu0 0.0
    %247 = vmatprep.subr.mxu0 0.0
    %248 = vmatpush1.msra.mxu0 0.0
    %249 = vmatprep.subr.mxu0 0.0
    %250 = vmatpush1.msra.mxu0 0.0
    %251 = vmatprep.subr.mxu0 0.0
    %252 = vmatpush1.msra.mxu0 0.0
    %253 = vmatprep.subr.mxu0 0.0
    %254 = vmatpush1.msra.mxu0 0.0
    %255 = vmatprep.subr.mxu0 0.0
    %256 = vmatpush1.msra.mxu0 0.0
    %257 = vmatprep.subr.mxu0 0.0
    %258 = vmatpush1.msra.mxu0 0.0
    %259 = vmatprep.subr.mxu0 0.0
    %260 = vmatpush1.msra.mxu0 0.0
    %261 = vmatprep.subr.mxu0 0.0
    %262 = vmatpush1.msra.mxu0 0.0
    %263 = vmatprep.subr.mxu0 0.0
    %264 = vmatpush1.msra.mxu0 0.0
    %265 = vmatprep.subr.mxu0 0.0
    %266 = vmatpush1.msra.mxu0 0.0
    %267 = vmatprep.subr.mxu0 0.0
    %268 = vmatpush1.msra.mxu0 0.0
    %269 = vmatprep.subr.mxu0 0.0
    %270 = vmatpush1.msra.mxu0 0.0
    %271 = vmatprep.subr.mxu0 0.0
    %272 = vmatpush1.msra.mxu0 0.0
    %273 = vmatprep.subr.mxu0 0.0
    %274 = vmatpush1.msra.mxu0 0.0
    %275 = vmatprep.subr.mxu0 0.0
    %276 = vmatpush1.msra.mxu0 0.0
    %277 = vmatprep.subr.mxu0 0.0
    %278 = vmatpush1.msra.mxu0 0.0
    %279 = vmatprep.subr.mxu0 0.0
    %280 = vmatpush1.msra.mxu0 0.0
    %281 = vmatprep.mubr.f32.mxu0 0.0
    %282 = vmatmul.mubr.f32.gmra.mrb[0].mxu0 %v215
    %v283 = vpop.f32.mrb[0].mxu0
    %v284 = vadd.f32 0.0, %v283
    %v285 = vpop.f32.mrb[0].mxu0
    %286 = vdwg.mxu0
    %v287 = vmul.f32 %v135, %v46
    %v289 = vsel %vm64, %v287, 0
    %291 = vmatprep.subr.mxu0 0.0
    %292 = vmatpush1.msra.mxu0 1.0
    %293 = vmatprep.subr.mxu0 0.0
    %294 = vmatpush1.msra.mxu0 1.0
    %295 = vmatprep.subr.mxu0 0.0
    %296 = vmatpush1.msra.mxu0 1.0
    %297 = vmatprep.subr.mxu0 0.0
    %298 = vmatpush1.msra.mxu0 1.0
    %299 = vmatprep.subr.mxu0 0.0
    %300 = vmatpush1.msra.mxu0 0.0
    %301 = vmatprep.subr.mxu0 0.0
    %302 = vmatpush1.msra.mxu0 0.0
    %303 = vmatprep.subr.mxu0 0.0
    %304 = vmatpush1.msra.mxu0 0.0
    %305 = vmatprep.subr.mxu0 0.0
    %306 = vmatpush1.msra.mxu0 0.0
    %307 = vmatprep.subr.mxu0 0.0
    %308 = vmatpush1.msra.mxu0 0.0
    %309 = vmatprep.subr.mxu0 0.0
    %310 = vmatpush1.msra.mxu0 0.0
    %311 = vmatprep.subr.mxu0 0.0
    %312 = vmatpush1.msra.mxu0 0.0
    %313 = vmatprep.subr.mxu0 0.0
    %314 = vmatpush1.msra.mxu0 0.0
    %315 = vmatprep.subr.mxu0 0.0
    %316 = vmatpush1.msra.mxu0 0.0
    %317 = vmatprep.subr.mxu0 0.0
    %318 = vmatpush1.msra.mxu0 0.0
    %319 = vmatprep.subr.mxu0 0.0
    %320 = vmatpush1.msra.mxu0 0.0
    %321 = vmatprep.subr.mxu0 0.0
    %322 = vmatpush1.msra.mxu0 0.0
    %323 = vmatprep.subr.mxu0 0.0
    %324 = vmatpush1.msra.mxu0 0.0
    %325 = vmatprep.subr.mxu0 0.0
    %326 = vmatpush1.msra.mxu0 0.0
    %327 = vmatprep.subr.mxu0 0.0
    %328 = vmatpush1.msra.mxu0 0.0
    %329 = vmatprep.subr.mxu0 0.0
    %330 = vmatpush1.msra.mxu0 0.0
    %331 = vmatprep.subr.mxu0 0.0
    %332 = vmatpush1.msra.mxu0 0.0
    %333 = vmatprep.subr.mxu0 0.0
    %334 = vmatpush1.msra.mxu0 0.0
    %335 = vmatprep.subr.mxu0 0.0
    %336 = vmatpush1.msra.mxu0 0.0
    %337 = vmatprep.subr.mxu0 0.0
    %338 = vmatpush1.msra.mxu0 0.0
    %339 = vmatprep.subr.mxu0 0.0
    %340 = vmatpush1.msra.mxu0 0.0
    %341 = vmatprep.subr.mxu0 0.0
    %342 = vmatpush1.msra.mxu0 0.0
    %343 = vmatprep.subr.mxu0 0.0
    %344 = vmatpush1.msra.mxu0 0.0
    %345 = vmatprep.subr.mxu0 0.0
    %346 = vmatpush1.msra.mxu0 0.0
    %347 = vmatprep.subr.mxu0 0.0
    %348 = vmatpush1.msra.mxu0 0.0
    %349 = vmatprep.subr.mxu0 0.0
    %350 = vmatpush1.msra.mxu0 0.0
    %351 = vmatprep.subr.mxu0 0.0
    %352 = vmatpush1.msra.mxu0 0.0
    %353 = vmatprep.subr.mxu0 0.0
    %354 = vmatpush1.msra.mxu0 0.0
    %355 = vmatprep.mubr.f32.mxu0 0.0
    %356 = vmatmul.mubr.f32.gmra.mrb[0].mxu0 %v289
    %v357 = vpop.f32.mrb[0].mxu0
    %v358 = vadd.f32 0.0, %v357
    %v359 = vpop.f32.mrb[0].mxu0
    %360 = vdwg.mxu0
    %v361 = vlog2.pop %v284
    %v362 = vmul.f32 %v361, 0.6931472
    %v363 = vadd.f32 %v210, %v362
    %v364 = vmul.f32 %v205, %v363
    %v365 = vsub.f32 %v364, %v358
    %vm366 = vcmask 7168
    %v367 = vsel %vm366, %v365, 0.0
    %368 = vadd.xlane.f32.xlu0 %v367
    %v369 = vpop.xlane.xlu0 %368
    %v370 = vrot.slane %v369, 4
    %v371 = vadd.f32 %v369, %v370
    %v372 = vrot.slane %v371, 2
    %v373 = vadd.f32 %v371, %v372
    %v374 = vrot.slane %v373, 1
    %v375 = vadd.f32 %v373, %v374
    %s376 = vtos %v375
    %v377 = vstv %s376
    %378 = vst [vmem:[#allocation7] sm:$0xff] %v377
    // Predicated region
    $region26: #{tpu_custom_call.1} parent=1 // pred_check
      _
    $region27: #{tpu_custom_call.1} parent=1 // pred_check_branch
      %380 = sbr.rel (0) target = $region29
    $region28: #{tpu_custom_call.1} parent=1 // pred_region
      %s382 = ssub.s32 128, 128
      %383 = vsyncadd [#allocation4], %s382
      %s385 = sshll.u32 [#allocation7], 4
      %s386 = int_to_ptr.vmem [resolvable:$true] %s385
      %388 = dma.vmem_to_hbm [thread:$0]  %s386, 128, %s4, [#allocation4]
    $region29: #{tpu_custom_call.1} parent=1 // pred_fallthru
      _
    // Predicated region
    $region30: #{tpu_custom_call.1} parent=1 // pred_check
      _
    $region31: #{tpu_custom_call.1} parent=1 // pred_check_branch
      %390 = sbr.rel (0) target = $region33
    $region32: #{tpu_custom_call.1} parent=1 // pred_region
      %391 = dma.done [#allocation4], 128
    $region33: #{tpu_custom_call.1} parent=1 // pred_fallthru
      _
    %392 = vsyncpa [#allocation3], 1
    %393 = vsyncpa [#allocation6], 1
    %394 = vsyncpa [#allocation4], 1

</llo_original>
